<compile_context>
chip_gen: v6e
topology: v6e:2x2x1
jax: 0.10.0
libtpu: 0.0.40
codegen_flags: <defaults>
</compile_context>

<pallas_src>
import math

import jax
import jax.numpy as jnp
from jax.experimental import pallas as pl
from jax.experimental.pallas import tpu as pltpu

# ---- static module configuration (defaults of the PyTorch Filterbank) ----
N_MELS = 40
LOG_MEL = True
FILTER_SHAPE = "triangular"   # only default shape implemented
F_MIN = 0.0
F_MAX = 8000.0
N_FFT = 400
SAMPLE_RATE = 16000
POWER_SPECTROGRAM = 2
AMIN = 1e-10
REF_VALUE = 1.0
TOP_DB = 80.0
N_STFT = N_FFT // 2 + 1                       # 201
MULTIPLIER = 10.0 if POWER_SPECTROGRAM == 2 else 20.0
DB_MULTIPLIER = math.log10(max(AMIN, REF_VALUE))   # = 0.0 for defaults


def _to_mel(hz):
    return 2595.0 * math.log10(1.0 + hz / 700.0)


def make_fbank_matrix():
    """Deterministic triangular mel filterbank matrix [n_stft, n_mels].
    (Parameter/buffer setup -> plain JAX, freeze=True path.)"""
    mel = jnp.linspace(_to_mel(F_MIN), _to_mel(F_MAX), N_MELS + 2,
                       dtype=jnp.float32)
    hz = 700.0 * (jnp.power(10.0, mel / 2595.0) - 1.0)
    band = hz[1:] - hz[:-1]
    band = band[:-1]                        # [n_mels]
    f_central = hz[1:-1]                    # [n_mels]
    # freeze=True: buffers stored normalized by sample_rate
    f_central = f_central / SAMPLE_RATE
    band = band / SAMPLE_RATE
    # forward-time clamps
    f_central = jnp.clip(f_central, 0.0, 0.5)
    band = jnp.clip(band, 3.1 / 16000.0, 603.7 / 16000.0)
    all_freqs = jnp.linspace(0.0, SAMPLE_RATE // 2, N_STFT, dtype=jnp.float32)
    f_central_mat = (f_central * SAMPLE_RATE)[:, None]       # [n_mels, 1]
    band_mat = (band * SAMPLE_RATE)[:, None]                 # [n_mels, 1]
    slope = (all_freqs[None, :] - f_central_mat) / band_mat  # [n_mels, n_stft]
    left = slope + 1.0
    right = -slope + 1.0
    fbank = jnp.maximum(0.0, jnp.minimum(left, right))       # triangular
    return fbank.T.astype(jnp.float32)                       # [n_stft, n_mels]


def _round_up(x, m):
    return ((x + m - 1) // m) * m


# ---------------- Pallas wrapper ----------------

def filterbank_forward(spectrogram, fbank_matrix, *, tile_n=2048,
                       vmem_limit_bytes=None):
    """spectrogram: [B, T, n_stft]; fbank_matrix: [n_stft, n_mels]."""
    B, T, F = spectrogram.shape
    M = fbank_matrix.shape[1]
    N = B * T

    # Keep the caller's dtype for the dominant HBM read (no wrapper-side
    # astype copy).  If the input is bf16, cast the (tiny, VMEM-resident)
    # filterbank matrix to bf16 too so the MXU runs a single-pass bf16
    # matmul; accumulation stays f32 via preferred_element_type.
    x = spectrogram.reshape(N, F)
    if x.dtype == jnp.bfloat16:
        fb = fbank_matrix.astype(jnp.bfloat16)
    else:
        x = x.astype(jnp.float32) if x.dtype != jnp.float32 else x
        fb = fbank_matrix.astype(jnp.float32)

    # Tile: as large as useful, multiple of 8 (sublanes), no wrapper pad.
    tile = min(tile_n, _round_up(N, 8))
    tile = max(8, (tile // 8) * 8)
    grid = (pl.cdiv(N, tile),)
    n_tiles = grid[0]
    rem = N % tile            # rows valid in the last (partial) block; 0 = full

    def kernel(x_ref, fb_ref, o_ref, mx_ref):
        # x_ref: (tile, F); fb_ref: (F, M) resident (constant index_map);
        # o_ref: (tile, M); mx_ref: (1, M) per-tile column max.
        y = jnp.dot(x_ref[...], fb_ref[...],
                    preferred_element_type=jnp.float32)
        if LOG_MEL:
            y = (MULTIPLIER * jnp.log10(jnp.maximum(y, AMIN))
                 - MULTIPLIER * DB_MULTIPLIER)
        o_ref[...] = y.astype(o_ref.dtype)
        if rem == 0:
            # every block is full -> plain column max, no mask work
            mx_ref[...] = jnp.max(y, axis=0, keepdims=True)
        else:
            # mask the garbage tail rows of the last (partial) block only;
            # their output store is masked by Pallas on writeback.
            is_last = pl.program_id(0) == pl.num_programs(0) - 1
            row = jax.lax.broadcasted_iota(jnp.int32, (tile, 1), 0)
            valid = jnp.logical_or(jnp.logical_not(is_last), row < rem)
            masked = jnp.where(valid, y, -jnp.inf)
            mx_ref[...] = jnp.max(masked, axis=0, keepdims=True)

    compiler_params = pltpu.CompilerParams(
        dimension_semantics=("parallel",),
        vmem_limit_bytes=vmem_limit_bytes)

    x_db, tile_max = pl.pallas_call(
        kernel,
        out_shape=(jax.ShapeDtypeStruct((N, M), jnp.float32),
                   jax.ShapeDtypeStruct((n_tiles, M), jnp.float32)),
        grid_spec=pltpu.PrefetchScalarGridSpec(
            num_scalar_prefetch=0,
            grid=grid,
            in_specs=[pl.BlockSpec((tile, F), lambda i: (i, 0)),
                      # constant block index -> fbank matrix stays resident
                      pl.BlockSpec((F, M), lambda i: (0, 0))],
            out_specs=[pl.BlockSpec((tile, M), lambda i: (i, 0)),
                       pl.BlockSpec((1, M), lambda i: (i, 0))],
        ),
        compiler_params=compiler_params,
    )(x, fb)

    if not LOG_MEL:
        return x_db.reshape(B, T, M)

    # Global top_db clamp: tiny fused XLA epilogue.  Reads only the
    # (n_tiles, M) per-tile maxes plus one pass over the [N, M] output.
    thr = jnp.max(tile_max) - TOP_DB
    return jnp.maximum(x_db, thr).reshape(B, T, M)


# ---------------- reference (pure JAX) for sanity check ----------------

def filterbank_reference(spectrogram, fbank_matrix):
    y = jnp.einsum("btf,fm->btm", spectrogram, fbank_matrix,
                   precision=jax.lax.Precision.HIGHEST)
    y = MULTIPLIER * jnp.log10(jnp.maximum(y, AMIN)) - MULTIPLIER * DB_MULTIPLIER
    thr = jnp.max(y) - TOP_DB
    return jnp.maximum(y, thr)


if __name__ == "__main__":
    key = jax.random.PRNGKey(0)
    B, T = 2, 64
    spectrogram = jax.random.normal(key, (B, T, N_STFT), dtype=jnp.float32)

    fbank_matrix = make_fbank_matrix()          # [201, 40]

    out = filterbank_forward(spectrogram, fbank_matrix)
    out = jax.block_until_ready(out)

    ref = filterbank_reference(spectrogram, fbank_matrix)
    assert out.shape == (B, T, N_MELS), out.shape
    assert jnp.allclose(out, ref, rtol=1e-3, atol=1e-2), \
        float(jnp.max(jnp.abs(out - ref)))

    print("KERNEL_OK")
</pallas_src>

<mosaic_0001>
module attributes {stable_mosaic.version = 11 : i64} {
  func.func @kernel(%arg0: i32, %arg1: memref<128x201xf32, #tpu.memory_space<vmem>>, %arg2: memref<201x40xf32, #tpu.memory_space<vmem>>, %arg3: memref<128x40xf32, #tpu.memory_space<vmem>>, %arg4: memref<1x40xf32, #tpu.memory_space<vmem>>) attributes {dimension_semantics = [#tpu.dimension_semantics<parallel>], iteration_bounds = array<i64: 1>, scalar_prefetch = 0 : i64, scratch_operands = 0 : i64, tpu.core_type = #tpu.core_type<tc>, window_params = [{transform_indices = @transform_0, window_bounds = array<i64: 128, 201>}, {pipeline_mode = #tpu.pipeline_mode<synchronous>, transform_indices = @transform_1, window_bounds = array<i64: 201, 40>}, {transform_indices = @transform_2, window_bounds = array<i64: 128, 40>}, {transform_indices = @transform_3, window_bounds = array<i64: 1, 40>}]} {
    %c0 = arith.constant 0 : index
    %c0_0 = arith.constant 0 : index
    %0 = vector.load %arg1[%c0, %c0_0] : memref<128x201xf32, #tpu.memory_space<vmem>>, vector<128x201xf32>
    %c0_1 = arith.constant 0 : index
    %c0_2 = arith.constant 0 : index
    %1 = vector.load %arg2[%c0_1, %c0_2] : memref<201x40xf32, #tpu.memory_space<vmem>>, vector<201x40xf32>
    %cst = arith.constant dense<0.000000e+00> : vector<128x40xf32>
    %2 = tpu.matmul %0, %1, %cst {dimension_numbers = #tpu.dot_dimension_numbers<[1], [0], [0], [1], [0, 0, 1, 1], [], []>} : vector<128x201xf32>, vector<201x40xf32>, vector<128x40xf32> -> vector<128x40xf32>
    %cst_3 = arith.constant 1.000000e-10 : f32
    %3 = vector.broadcast %cst_3 : f32 to vector<128x40xf32>
    %4 = arith.maximumf %2, %3 : vector<128x40xf32>
    %5 = math.log %4 : vector<128x40xf32>
    %cst_4 = arith.constant 0.434294492 : f32
    %6 = vector.broadcast %cst_4 : f32 to vector<128x40xf32>
    %7 = arith.mulf %5, %6 : vector<128x40xf32>
    %cst_5 = arith.constant 1.000000e+01 : f32
    %8 = vector.broadcast %cst_5 : f32 to vector<128x40xf32>
    %9 = arith.mulf %8, %7 : vector<128x40xf32>
    %cst_6 = arith.constant 0.000000e+00 : f32
    %10 = vector.broadcast %cst_6 : f32 to vector<128x40xf32>
    %11 = arith.subf %9, %10 : vector<128x40xf32>
    %c0_7 = arith.constant 0 : index
    %c0_8 = arith.constant 0 : index
    %12 = vector.load %arg3[%c0_7, %c0_8] : memref<128x40xf32, #tpu.memory_space<vmem>>, vector<128x40xf32>
    tpu.vector_store %arg3[%c0_7, %c0_8], %11 {strides = array<i32>} : memref<128x40xf32, #tpu.memory_space<vmem>>, vector<128x40xf32>,
    %cst_9 = arith.constant dense<0xFF800000> : vector<40xf32>
    %13 = vector.multi_reduction <maximumf>, %11, %cst_9 [0] : vector<128x40xf32> to vector<40xf32>
    %14 = vector.shape_cast %13 : vector<40xf32> to vector<1x40xf32>
    %c0_10 = arith.constant 0 : index
    %c0_11 = arith.constant 0 : index
    %15 = vector.load %arg4[%c0_10, %c0_11] : memref<1x40xf32, #tpu.memory_space<vmem>>, vector<1x40xf32>
    tpu.vector_store %arg4[%c0_10, %c0_11], %14 {strides = array<i32>} : memref<1x40xf32, #tpu.memory_space<vmem>>, vector<1x40xf32>,
    return
  }
  func.func @transform_0(%arg0: i32) -> (i32, i32) {
    %c0_i32 = arith.constant 0 : i32
    %c0_i32_0 = arith.constant 0 : i32
    return %arg0, %c0_i32 : i32, i32
  }
  func.func @transform_1(%arg0: i32) -> (i32, i32) {
    %c0_i32 = arith.constant 0 : i32
    %c0_i32_0 = arith.constant 0 : i32
    %c0_i32_1 = arith.constant 0 : i32
    return %c0_i32, %c0_i32_0 : i32, i32
  }
  func.func @transform_2(%arg0: i32) -> (i32, i32) {
    %c0_i32 = arith.constant 0 : i32
    %c0_i32_0 = arith.constant 0 : i32
    return %arg0, %c0_i32 : i32, i32
  }
  func.func @transform_3(%arg0: i32) -> (i32, i32) {
    %c0_i32 = arith.constant 0 : i32
    %c0_i32_0 = arith.constant 0 : i32
    return %arg0, %c0_i32 : i32, i32
  }
}

</mosaic_0001>

<llo_original>
// kernel: tpu_custom_call.1
$region0: #{tpu_custom_call.1}
  #allocation0 [shape = 'u32[]', space=smem, size = 0x4, offset = 0x4, fixed_abs, tag = 'smem constant byte address 0x4 - core index']
  #allocation1 [shape = 'u32[144,128]{1,0:T(1,128)}', space=vmem, size = 0x12000, scoped, tag = 'internal scratch']
  %s0 = inlined_call_operand.vmem [shape: f32[128,201], index: 0, kind: input, shape index: {}]
  %s1 = inlined_call_operand.vmem [shape: f32[201,40], index: 1, kind: input, shape index: {}]
  %s2 = inlined_call_operand.vmem [shape: f32[128,40], index: 2, kind: output, shape index: {0}]
  %s3 = inlined_call_operand.hbm [shape: f32[1,40], index: 3, kind: output, shape index: {1}]
  %4 = xla_tuple %s2, %s3
  %s5 = sld [smem:[#allocation0]]
  $region26: #{tpu_custom_call.1} parent=0
    _
  %s7 = ssub.s32 1, %s5
  %s8 = scalar_select 0, %s7, %s5
  $region1: #{tpu_custom_call.1} parent=0
    #allocation2 [shape = 'u8[512]{0}', space=vmem, size = 0x400, scoped, tag = 'output window, operand 1, single buffered']
    #allocation3 [shape = 's32[1]{0}', space=sflag, size = 0x4, scoped, tag = 'scoped memory for tpu_custom_call.1']
    %9 = vsyncpa [#allocation3], 0
    // Predicated region
    $region2: #{tpu_custom_call.1} parent=1 // pred_check
      _
    $region3: #{tpu_custom_call.1} parent=1 // pred_check_branch
      %11 = sbr.rel (0) target = $region5
    $region4: #{tpu_custom_call.1} parent=1 // pred_region
      _
    $region5: #{tpu_custom_call.1} parent=1 // pred_fallthru
      _
    // Predicated region
    $region6: #{tpu_custom_call.1} parent=1 // pred_check
      _
    $region7: #{tpu_custom_call.1} parent=1 // pred_check_branch
      %13 = sbr.rel (0) target = $region9
    $region8: #{tpu_custom_call.1} parent=1 // pred_region
      _
    $region9: #{tpu_custom_call.1} parent=1 // pred_fallthru
      _
    %v14 = vld [vmem:[%s0] sm:$0xff]
    %v15 = vld [vmem:[%s0 + $0x8] sm:$0xff]
    %v16 = vld [vmem:[%s0 + $0x10] sm:$0xff]
    %v17 = vld [vmem:[%s0 + $0x18] sm:$0xff]
    %v18 = vld [vmem:[%s0 + $0x20] sm:$0xff]
    %v19 = vld [vmem:[%s0 + $0x28] sm:$0xff]
    %v20 = vld [vmem:[%s0 + $0x30] sm:$0xff]
    %v21 = vld [vmem:[%s0 + $0x38] sm:$0xff]
    %v22 = vld [vmem:[%s0 + $0x40] sm:$0xff]
    %v23 = vld [vmem:[%s0 + $0x48] sm:$0xff]
    %v24 = vld [vmem:[%s0 + $0x50] sm:$0xff]
    %v25 = vld [vmem:[%s0 + $0x58] sm:$0xff]
    %v26 = vld [vmem:[%s0 + $0x60] sm:$0xff]
    %v27 = vld [vmem:[%s0 + $0x68] sm:$0xff]
    %v28 = vld [vmem:[%s0 + $0x70] sm:$0xff]
    %v29 = vld [vmem:[%s0 + $0x78] sm:$0xff]
    %v30 = vld [vmem:[%s0 + $0x80] sm:$0xff]
    %v31 = vld [vmem:[%s0 + $0x88] sm:$0xff]
    %v32 = vld [vmem:[%s0 + $0x90] sm:$0xff]
    %v33 = vld [vmem:[%s0 + $0x98] sm:$0xff]
    %v34 = vld [vmem:[%s0 + $0xa0] sm:$0xff]
    %v35 = vld [vmem:[%s0 + $0xa8] sm:$0xff]
    %v36 = vld [vmem:[%s0 + $0xb0] sm:$0xff]
    %v37 = vld [vmem:[%s0 + $0xb8] sm:$0xff]
    %v38 = vld [vmem:[%s0 + $0xc0] sm:$0xff]
    %v39 = vld [vmem:[%s0 + $0xc8] sm:$0xff]
    %v40 = vld [vmem:[%s0 + $0xd0] sm:$0xff]
    %v41 = vld [vmem:[%s0 + $0xd8] sm:$0xff]
    %v42 = vld [vmem:[%s0 + $0xe0] sm:$0xff]
    %v43 = vld [vmem:[%s0 + $0xe8] sm:$0xff]
    %v44 = vld [vmem:[%s0 + $0xf0] sm:$0xff]
    %v45 = vld [vmem:[%s0 + $0xf8] sm:$0xff]
    %v46 = vld [vmem:[%s1] sm:$0xff]
    %v47 = vld [vmem:[%s1 + $0x8] sm:$0xff]
    %v48 = vld [vmem:[%s1 + $0x10] sm:$0xff]
    %v49 = vld [vmem:[%s1 + $0x18] sm:$0xff]
    %v50 = vld [vmem:[%s1 + $0x20] sm:$0xff]
    %v51 = vld [vmem:[%s1 + $0x28] sm:$0xff]
    %v52 = vld [vmem:[%s1 + $0x30] sm:$0xff]
    %v53 = vld [vmem:[%s1 + $0x38] sm:$0xff]
    %v54 = vld [vmem:[%s1 + $0x40] sm:$0xff]
    %v55 = vld [vmem:[%s1 + $0x48] sm:$0xff]
    %v56 = vld [vmem:[%s1 + $0x50] sm:$0xff]
    %v57 = vld [vmem:[%s1 + $0x58] sm:$0xff]
    %v58 = vld [vmem:[%s1 + $0x60] sm:$0xff]
    %v59 = vld [vmem:[%s1 + $0x68] sm:$0xff]
    %v60 = vld [vmem:[%s1 + $0x70] sm:$0xff]
    %v61 = vld [vmem:[%s1 + $0x78] sm:$0xff]
    %v62 = vld [vmem:[%s1 + $0x80] sm:$0xff]
    %v63 = vld [vmem:[%s1 + $0x88] sm:$0xff]
    %v64 = vld [vmem:[%s1 + $0x90] sm:$0xff]
    %v65 = vld [vmem:[%s1 + $0x98] sm:$0xff]
    %v66 = vld [vmem:[%s1 + $0xa0] sm:$0xff]
    %v67 = vld [vmem:[%s1 + $0xa8] sm:$0xff]
    %v68 = vld [vmem:[%s1 + $0xb0] sm:$0xff]
    %v69 = vld [vmem:[%s1 + $0xb8] sm:$0xff]
    %v70 = vld [vmem:[%s1 + $0xc0] sm:$0xff]
    %v71 = vld [vmem:[%s1 + $0xc8] sm:$0x1]
    %vm72 = vcmask 596992
    %v74 = vsel %vm72, %v15, 0
    %v77 = vsel %vm72, %v17, 0
    %v80 = vsel %vm72, %v19, 0
    %v83 = vsel %vm72, %v21, 0
    %v86 = vsel %vm72, %v23, 0
    %v89 = vsel %vm72, %v25, 0
    %v92 = vsel %vm72, %v27, 0
    %v95 = vsel %vm72, %v29, 0
    %v98 = vsel %vm72, %v31, 0
    %v101 = vsel %vm72, %v33, 0
    %v104 = vsel %vm72, %v35, 0
    %v107 = vsel %vm72, %v37, 0
    %v110 = vsel %vm72, %v39, 0
    %v113 = vsel %vm72, %v41, 0
    %v116 = vsel %vm72, %v43, 0
    %v119 = vsel %vm72, %v45, 0
    %vm121 = vcmask 1040384
    %v123 = vsel %vm121, %v71, 0
    %125 = vmatprep.subr.mxu0 0.0
    %126 = vmatpush1.msra.mxu0 %v61
    %127 = vmatprep.subr.mxu0 0.0
    %128 = vmatpush1.msra.mxu0 %v60
    %129 = vmatprep.subr.mxu0 0.0
    %130 = vmatpush1.msra.mxu0 %v59
    %131 = vmatprep.subr.mxu0 0.0
    %132 = vmatpush1.msra.mxu0 %v58
    %133 = vmatprep.subr.mxu0 0.0
    %134 = vmatpush1.msra.mxu0 %v57
    %135 = vmatprep.subr.mxu0 0.0
    %136 = vmatpush1.msra.mxu0 %v56
    %137 = vmatprep.subr.mxu0 0.0
    %138 = vmatpush1.msra.mxu0 %v55
    %139 = vmatprep.subr.mxu0 0.0
    %140 = vmatpush1.msra.mxu0 %v54
    %141 = vmatprep.subr.mxu0 0.0
    %142 = vmatpush1.msra.mxu0 %v53
    %143 = vmatprep.subr.mxu0 0.0
    %144 = vmatpush1.msra.mxu0 %v52
    %145 = vmatprep.subr.mxu0 0.0
    %146 = vmatpush1.msra.mxu0 %v51
    %147 = vmatprep.subr.mxu0 0.0
    %148 = vmatpush1.msra.mxu0 %v50
    %149 = vmatprep.subr.mxu0 0.0
    %150 = vmatpush1.msra.mxu0 %v49
    %151 = vmatprep.subr.mxu0 0.0
    %152 = vmatpush1.msra.mxu0 %v48
    %153 = vmatprep.subr.mxu0 0.0
    %154 = vmatpush1.msra.mxu0 %v47
    %155 = vmatprep.subr.mxu0 0.0
    %156 = vmatpush1.msra.mxu0 %v46
    %157 = vmatprep.subr.mxu0 0.0
    %158 = vmatpush2.msra.mxu0 0.0
    %159 = vmatprep.subr.mxu0 0.0
    %160 = vmatpush2.msra.mxu0 0.0
    %161 = vmatprep.subr.mxu0 0.0
    %162 = vmatpush2.msra.mxu0 0.0
    %163 = vmatprep.subr.mxu0 0.0
    %164 = vmatpush2.msra.mxu0 0.0
    %165 = vmatprep.subr.mxu0 0.0
    %166 = vmatpush2.msra.mxu0 0.0
    %167 = vmatprep.subr.mxu0 0.0
    %168 = vmatpush2.msra.mxu0 0.0
    %169 = vmatprep.subr.mxu0 0.0
    %170 = vmatpush2.msra.mxu0 %v123
    %171 = vmatprep.subr.mxu0 0.0
    %172 = vmatpush2.msra.mxu0 %v70
    %173 = vmatprep.subr.mxu0 0.0
    %174 = vmatpush2.msra.mxu0 %v69
    %175 = vmatprep.subr.mxu0 0.0
    %176 = vmatpush2.msra.mxu0 %v68
    %177 = vmatprep.subr.mxu0 0.0
    %178 = vmatpush2.msra.mxu0 %v67
    %179 = vmatprep.subr.mxu0 0.0
    %180 = vmatpush2.msra.mxu0 %v66
    %181 = vmatprep.subr.mxu0 0.0
    %182 = vmatpush2.msra.mxu0 %v65
    %183 = vmatprep.subr.mxu0 0.0
    %184 = vmatpush2.msra.mxu0 %v64
    %185 = vmatprep.subr.mxu0 0.0
    %186 = vmatpush2.msra.mxu0 %v63
    %187 = vmatprep.subr.mxu0 0.0
    %188 = vmatpush2.msra.mxu0 %v62
    %189 = vmatprep.mubr.f32.mxu0 %v74
    %190 = vmatmul.mubr.f32.gmra.mxu0 %v14
    %v191 = vpop.f32.mrf.mxu0
    %v192 = vadd.f32 0.0, %v191
    %v193 = vpop.f32.mrf.mxu0
    %194 = vmatprep.mubr.f32.mxu0 %v77
    %195 = vmatmul.mubr.f32.gmra.mxu0 %v16
    %v196 = vpop.f32.mrf.mxu0
    %v197 = vadd.f32 0.0, %v196
    %v198 = vpop.f32.mrf.mxu0
    %199 = vmatprep.mubr.f32.mxu0 %v80
    %200 = vmatmul.mubr.f32.gmra.mxu0 %v18
    %v201 = vpop.f32.mrf.mxu0
    %v202 = vadd.f32 0.0, %v201
    %v203 = vpop.f32.mrf.mxu0
    %204 = vmatprep.mubr.f32.mxu0 %v83
    %205 = vmatmul.mubr.f32.gmra.mxu0 %v20
    %v206 = vpop.f32.mrf.mxu0
    %v207 = vadd.f32 0.0, %v206
    %v208 = vpop.f32.mrf.mxu0
    %209 = vmatprep.mubr.f32.mxu0 %v86
    %210 = vmatmul.mubr.f32.gmra.mxu0 %v22
    %v211 = vpop.f32.mrf.mxu0
    %v212 = vadd.f32 0.0, %v211
    %v213 = vpop.f32.mrf.mxu0
    %214 = vmatprep.mubr.f32.mxu0 %v89
    %215 = vmatmul.mubr.f32.gmra.mxu0 %v24
    %v216 = vpop.f32.mrf.mxu0
    %v217 = vadd.f32 0.0, %v216
    %v218 = vpop.f32.mrf.mxu0
    %219 = vmatprep.mubr.f32.mxu0 %v92
    %220 = vmatmul.mubr.f32.gmra.mxu0 %v26
    %v221 = vpop.f32.mrf.mxu0
    %v222 = vadd.f32 0.0, %v221
    %v223 = vpop.f32.mrf.mxu0
    %224 = vmatprep.mubr.f32.mxu0 %v95
    %225 = vmatmul.mubr.f32.gmra.mxu0 %v28
    %v226 = vpop.f32.mrf.mxu0
    %v227 = vadd.f32 0.0, %v226
    %v228 = vpop.f32.mrf.mxu0
    %229 = vmatprep.mubr.f32.mxu0 %v98
    %230 = vmatmul.mubr.f32.gmra.mxu0 %v30
    %v231 = vpop.f32.mrf.mxu0
    %v232 = vadd.f32 0.0, %v231
    %v233 = vpop.f32.mrf.mxu0
    %234 = vmatprep.mubr.f32.mxu0 %v101
    %235 = vmatmul.mubr.f32.gmra.mxu0 %v32
    %v236 = vpop.f32.mrf.mxu0
    %v237 = vadd.f32 0.0, %v236
    %v238 = vpop.f32.mrf.mxu0
    %239 = vmatprep.mubr.f32.mxu0 %v104
    %240 = vmatmul.mubr.f32.gmra.mxu0 %v34
    %v241 = vpop.f32.mrf.mxu0
    %v242 = vadd.f32 0.0, %v241
    %v243 = vpop.f32.mrf.mxu0
    %244 = vmatprep.mubr.f32.mxu0 %v107
    %245 = vmatmul.mubr.f32.gmra.mxu0 %v36
    %v246 = vpop.f32.mrf.mxu0
    %v247 = vadd.f32 0.0, %v246
    %v248 = vpop.f32.mrf.mxu0
    %249 = vmatprep.mubr.f32.mxu0 %v110
    %250 = vmatmul.mubr.f32.gmra.mxu0 %v38
    %v251 = vpop.f32.mrf.mxu0
    %v252 = vadd.f32 0.0, %v251
    %v253 = vpop.f32.mrf.mxu0
    %254 = vmatprep.mubr.f32.mxu0 %v113
    %255 = vmatmul.mubr.f32.gmra.mxu0 %v40
    %v256 = vpop.f32.mrf.mxu0
    %v257 = vadd.f32 0.0, %v256
    %v258 = vpop.f32.mrf.mxu0
    %259 = vmatprep.mubr.f32.mxu0 %v116
    %260 = vmatmul.mubr.f32.gmra.mxu0 %v42
    %v261 = vpop.f32.mrf.mxu0
    %v262 = vadd.f32 0.0, %v261
    %v263 = vpop.f32.mrf.mxu0
    %264 = vmatprep.mubr.f32.mxu0 %v119
    %265 = vmatmul.mubr.f32.gmra.mxu0 %v44
    %v266 = vpop.f32.mrf.mxu0
    %v267 = vadd.f32 0.0, %v266
    %v268 = vpop.f32.mrf.mxu0
    %269 = vdwg.mxu0
    %v270 = vmax.f32 %v192, 1e-10
    %v271 = vmax.f32 %v197, 1e-10
    %v272 = vmax.f32 %v202, 1e-10
    %v273 = vmax.f32 %v207, 1e-10
    %v274 = vmax.f32 %v212, 1e-10
    %v275 = vmax.f32 %v217, 1e-10
    %v276 = vmax.f32 %v222, 1e-10
    %v277 = vmax.f32 %v227, 1e-10
    %v278 = vmax.f32 %v232, 1e-10
    %v279 = vmax.f32 %v237, 1e-10
    %v280 = vmax.f32 %v242, 1e-10
    %v281 = vmax.f32 %v247, 1e-10
    %v282 = vmax.f32 %v252, 1e-10
    %v283 = vmax.f32 %v257, 1e-10
    %v284 = vmax.f32 %v262, 1e-10
    %v285 = vmax.f32 %v267, 1e-10
    %v286 = vlog2.pop %v270
    %v287 = vmul.f32 %v286, 0.6931472
    %v288 = vlog2.pop %v271
    %v289 = vmul.f32 %v288, 0.6931472
    %v290 = vlog2.pop %v272
    %v291 = vmul.f32 %v290, 0.6931472
    %v292 = vlog2.pop %v273
    %v293 = vmul.f32 %v292, 0.6931472
    %v294 = vlog2.pop %v274
    %v295 = vmul.f32 %v294, 0.6931472
    %v296 = vlog2.pop %v275
    %v297 = vmul.f32 %v296, 0.6931472
    %v298 = vlog2.pop %v276
    %v299 = vmul.f32 %v298, 0.6931472
    %v300 = vlog2.pop %v277
    %v301 = vmul.f32 %v300, 0.6931472
    %v302 = vlog2.pop %v278
    %v303 = vmul.f32 %v302, 0.6931472
    %v304 = vlog2.pop %v279
    %v305 = vmul.f32 %v304, 0.6931472
    %v306 = vlog2.pop %v280
    %v307 = vmul.f32 %v306, 0.6931472
    %v308 = vlog2.pop %v281
    %v309 = vmul.f32 %v308, 0.6931472
    %v310 = vlog2.pop %v282
    %v311 = vmul.f32 %v310, 0.6931472
    %v312 = vlog2.pop %v283
    %v313 = vmul.f32 %v312, 0.6931472
    %v314 = vlog2.pop %v284
    %v315 = vmul.f32 %v314, 0.6931472
    %v316 = vlog2.pop %v285
    %v317 = vmul.f32 %v316, 0.6931472
    %v318 = vmul.f32 %v287, 0.4342945
    %v319 = vmul.f32 %v289, 0.4342945
    %v320 = vmul.f32 %v291, 0.4342945
    %v321 = vmul.f32 %v293, 0.4342945
    %v322 = vmul.f32 %v295, 0.4342945
    %v323 = vmul.f32 %v297, 0.4342945
    %v324 = vmul.f32 %v299, 0.4342945
    %v325 = vmul.f32 %v301, 0.4342945
    %v326 = vmul.f32 %v303, 0.4342945
    %v327 = vmul.f32 %v305, 0.4342945
    %v328 = vmul.f32 %v307, 0.4342945
    %v329 = vmul.f32 %v309, 0.4342945
    %v330 = vmul.f32 %v311, 0.4342945
    %v331 = vmul.f32 %v313, 0.4342945
    %v332 = vmul.f32 %v315, 0.4342945
    %v333 = vmul.f32 %v317, 0.4342945
    %v334 = vmul.f32 %v318, 10.0
    %v335 = vmul.f32 %v319, 10.0
    %v336 = vmul.f32 %v320, 10.0
    %v337 = vmul.f32 %v321, 10.0
    %v338 = vmul.f32 %v322, 10.0
    %v339 = vmul.f32 %v323, 10.0
    %v340 = vmul.f32 %v324, 10.0
    %v341 = vmul.f32 %v325, 10.0
    %v342 = vmul.f32 %v326, 10.0
    %v343 = vmul.f32 %v327, 10.0
    %v344 = vmul.f32 %v328, 10.0
    %v345 = vmul.f32 %v329, 10.0
    %v346 = vmul.f32 %v330, 10.0
    %v347 = vmul.f32 %v331, 10.0
    %v348 = vmul.f32 %v332, 10.0
    %v349 = vmul.f32 %v333, 10.0
    %vm350 = vcmask 326656
    %351 = vst.msk [vmem:[%s2] sm:$0xff] %vm350, %v334
    %352 = vst.msk [vmem:[%s2 + $0x8] sm:$0xff] %vm350, %v335
    %353 = vst.msk [vmem:[%s2 + $0x10] sm:$0xff] %vm350, %v336
    %354 = vst.msk [vmem:[%s2 + $0x18] sm:$0xff] %vm350, %v337
    %355 = vst.msk [vmem:[%s2 + $0x20] sm:$0xff] %vm350, %v338
    %356 = vst.msk [vmem:[%s2 + $0x28] sm:$0xff] %vm350, %v339
    %357 = vst.msk [vmem:[%s2 + $0x30] sm:$0xff] %vm350, %v340
    %358 = vst.msk [vmem:[%s2 + $0x38] sm:$0xff] %vm350, %v341
    %359 = vst.msk [vmem:[%s2 + $0x40] sm:$0xff] %vm350, %v342
    %360 = vst.msk [vmem:[%s2 + $0x48] sm:$0xff] %vm350, %v343
    %361 = vst.msk [vmem:[%s2 + $0x50] sm:$0xff] %vm350, %v344
    %362 = vst.msk [vmem:[%s2 + $0x58] sm:$0xff] %vm350, %v345
    %363 = vst.msk [vmem:[%s2 + $0x60] sm:$0xff] %vm350, %v346
    %364 = vst.msk [vmem:[%s2 + $0x68] sm:$0xff] %vm350, %v347
    %365 = vst.msk [vmem:[%s2 + $0x70] sm:$0xff] %vm350, %v348
    %366 = vst.msk [vmem:[%s2 + $0x78] sm:$0xff] %vm350, %v349
    %v367 = vsel %vm350, %v334, -inf
    %v368 = vsel %vm350, %v335, -inf
    %v369 = vsel %vm350, %v336, -inf
    %v370 = vsel %vm350, %v337, -inf
    %v371 = vsel %vm350, %v338, -inf
    %v372 = vmax.f32 %v367, %v371
    %v373 = vsel %vm350, %v339, -inf
    %v374 = vmax.f32 %v368, %v373
    %v375 = vsel %vm350, %v340, -inf
    %v376 = vmax.f32 %v369, %v375
    %v377 = vsel %vm350, %v341, -inf
    %v378 = vmax.f32 %v370, %v377
    %v379 = vsel %vm350, %v342, -inf
    %v380 = vmax.f32 %v372, %v379
    %v381 = vsel %vm350, %v343, -inf
    %v382 = vmax.f32 %v374, %v381
    %v383 = vsel %vm350, %v344, -inf
    %v384 = vmax.f32 %v376, %v383
    %v385 = vsel %vm350, %v345, -inf
    %v386 = vmax.f32 %v378, %v385
    %v387 = vsel %vm350, %v346, -inf
    %v388 = vmax.f32 %v380, %v387
    %v389 = vsel %vm350, %v347, -inf
    %v390 = vmax.f32 %v382, %v389
    %v391 = vsel %vm350, %v348, -inf
    %v392 = vmax.f32 %v384, %v391
    %v393 = vsel %vm350, %v349, -inf
    %v394 = vmax.f32 %v386, %v393
    %v395 = vmax.f32 %v388, %v390
    %v396 = vmax.f32 %v392, %v394
    %v397 = vmax.f32 %v395, %v396
    %v398 = vrot.slane %v397, 4
    %v399 = vmax.f32 %v397, %v398
    %v400 = vrot.slane %v399, 2
    %v401 = vmax.f32 %v399, %v400
    %v402 = vrot.slane %v401, 1
    %v403 = vmax.f32 %v401, %v402
    %vm404 = vcmask 319488
    %405 = vst.msk [vmem:[#allocation2] sm:$0x1] %vm404, %v403
    // Predicated region
    $region10: #{tpu_custom_call.1} parent=1 // pred_check
      _
    $region11: #{tpu_custom_call.1} parent=1 // pred_check_branch
      %407 = sbr.rel (0) target = $region13
    $region12: #{tpu_custom_call.1} parent=1 // pred_region
      _
    $region13: #{tpu_custom_call.1} parent=1 // pred_fallthru
      _
    // Predicated region
    $region14: #{tpu_custom_call.1} parent=1 // pred_check
      _
    $region15: #{tpu_custom_call.1} parent=1 // pred_check_branch
      %409 = sbr.rel (0) target = $region17
    $region16: #{tpu_custom_call.1} parent=1 // pred_region
      %s411 = ssub.s32 16, 16
      %412 = vsyncadd [#allocation3], %s411
      %s414 = sshll.u32 [#allocation2], 4
      %s415 = int_to_ptr.vmem [resolvable:$true] %s414
      %417 = dma.vmem_to_hbm [thread:$0]  %s415, 16, %s3, [#allocation3]
    $region17: #{tpu_custom_call.1} parent=1 // pred_fallthru
      _
    // Predicated region
    $region18: #{tpu_custom_call.1} parent=1 // pred_check
      _
    $region19: #{tpu_custom_call.1} parent=1 // pred_check_branch
      %419 = sbr.rel (0) target = $region21
    $region20: #{tpu_custom_call.1} parent=1 // pred_region
      _
    $region21: #{tpu_custom_call.1} parent=1 // pred_fallthru
      _
    // Predicated region
    $region22: #{tpu_custom_call.1} parent=1 // pred_check
      _
    $region23: #{tpu_custom_call.1} parent=1 // pred_check_branch
      %421 = sbr.rel (0) target = $region25
    $region24: #{tpu_custom_call.1} parent=1 // pred_region
      %422 = dma.done [#allocation3], 16
    $region25: #{tpu_custom_call.1} parent=1 // pred_fallthru
      _
    %423 = vsyncpa [#allocation3], 1

</llo_original>
